<compile_context>
chip_gen: v6e
topology: v6e:2x2x1
jax: 0.10.0
libtpu: 0.0.40
codegen_flags: <defaults>
</compile_context>

<pallas_src>
import jax
import jax.numpy as jnp
import numpy as np
from jax import lax
from jax.experimental import pallas as pl
from jax.experimental.pallas import tpu as pltpu


def fc_network_kernel(x_ref, w1_ref, b1_ref, w2_ref, b2_ref, w3_ref, b3_ref,
                      ot_ref):
    """Whole MLP fused in one kernel; last layer computed transposed so the
    output tile is lane-dense (batch on the 128-lane axis)."""
    x = x_ref[...]                                           # (bm, obs) cd
    # hidden layer 1: Linear + tanh (f32 accumulate, f32 bias/tanh)
    h = jnp.dot(x, w1_ref[...], preferred_element_type=jnp.float32)
    h = jnp.tanh(h + b1_ref[...])                            # (bm, h1) f32
    # hidden layer 2: Linear + tanh
    h = h.astype(w2_ref.dtype)
    h = jnp.dot(h, w2_ref[...], preferred_element_type=jnp.float32)
    h = jnp.tanh(h + b2_ref[...])                            # (bm, h2) f32
    # action_fc (no activation; use_tanh_action=False), transposed:
    #   out_t[c, n] = sum_k w3[c, k] * h[n, k]   -> (act_dim, bm)
    h = h.astype(w3_ref.dtype)
    out_t = lax.dot_general(
        w3_ref[...], h,
        dimension_numbers=(((1,), (1,)), ((), ())),
        preferred_element_type=jnp.float32)                  # (act, bm) f32
    ot_ref[...] = (out_t + b3_ref[...]).astype(ot_ref.dtype)


def _round_up(n, m):
    return ((n + m - 1) // m) * m


def fc_network_forward(x, params, *, bm=None, compute_dtype=jnp.bfloat16):
    """FCNetwork.forward.

    x:      (B, obs_dim)
    params: [(W1, b1), (W2, b2), (W3, b3)] in PyTorch nn.Linear layout,
            i.e. W_i (fan_out, fan_in), b_i (fan_out,).
    Returns (B, act_dim) float32.

    Note: for peak HBM efficiency store x / weights in `compute_dtype`
    (bf16) upstream so the .astype below is a no-op; pass
    compute_dtype=jnp.float32 for strict f32 module numerics.
    """
    (W1, B1), (W2, B2), (W3, B3) = params
    B, obs_dim = x.shape
    h1, h2, act_dim = W1.shape[0], W2.shape[0], W3.shape[0]
    assert W1.shape == (h1, obs_dim) and W2.shape == (h2, h1)
    assert W3.shape == (act_dim, h2)

    cd = compute_dtype
    # Kernel layouts: hidden weights as (fan_in, fan_out) for x @ W,
    # action weight kept in torch layout (act, h2) for the transposed dot,
    # biases as (1, N) / (act, 1) f32 for lane / sublane broadcast.
    x_c = x.astype(cd)
    w1c = W1.T.astype(cd)               # (obs, h1)
    w2c = W2.T.astype(cd)               # (h1, h2)
    w3c = W3.astype(cd)                 # (act, h2)
    b1f = B1.astype(jnp.float32)[None, :]      # (1, h1)
    b2f = B2.astype(jnp.float32)[None, :]      # (1, h2)
    b3f = B3.astype(jnp.float32)[:, None]      # (act, 1)

    LANE = 128
    if bm is None:
        # >=2 grid steps (v7x megacore), big enough to amortize per-step
        # overhead, multiple of 128 (lane-dense out tile, bf16 sublane tile).
        bm = max(LANE, min(16384, _round_up(pl.cdiv(B, 2), LANE)))
    else:
        bm = max(LANE, _round_up(bm, LANE))

    B_pad = _round_up(B, bm)
    if B_pad != B:
        x_c = jnp.pad(x_c, ((0, B_pad - B), (0, 0)))
    grid = (B_pad // bm,)

    itemsize = np.dtype(cd).itemsize
    cost = pl.CostEstimate(
        flops=2 * B_pad * (obs_dim * h1 + h1 * h2 + h2 * act_dim),
        transcendentals=B_pad * (h1 + h2),
        bytes_accessed=(B_pad * (obs_dim * itemsize + act_dim * 4)
                        + (w1c.size + w2c.size + w3c.size) * itemsize
                        + (b1f.size + b2f.size + b3f.size) * 4),
    )

    out_t = pl.pallas_call(
        fc_network_kernel,
        out_shape=jax.ShapeDtypeStruct((act_dim, B_pad), jnp.float32),
        grid_spec=pltpu.PrefetchScalarGridSpec(
            num_scalar_prefetch=0,
            grid=grid,
            in_specs=[
                pl.BlockSpec((bm, obs_dim), lambda i: (i, 0)),   # x tile
                pl.BlockSpec(w1c.shape, lambda i: (0, 0)),       # resident
                pl.BlockSpec(b1f.shape, lambda i: (0, 0)),
                pl.BlockSpec(w2c.shape, lambda i: (0, 0)),
                pl.BlockSpec(b2f.shape, lambda i: (0, 0)),
                pl.BlockSpec(w3c.shape, lambda i: (0, 0)),
                pl.BlockSpec(b3f.shape, lambda i: (0, 0)),
            ],
            out_specs=pl.BlockSpec((act_dim, bm), lambda i: (0, i)),
        ),
        compiler_params=pltpu.CompilerParams(
            dimension_semantics=("parallel",)),
        cost_estimate=cost,
    )(x_c, w1c, b1f, w2c, b2f, w3c, b3f)

    # Back to the module's (B, act_dim) layout; drop batch padding.
    return out_t[:, :B].T


def init_fc_params(key, layer_sizes):
    """nn.Linear-style init: W (fan_out, fan_in), b (fan_out,),
    both U(-1/sqrt(fan_in), 1/sqrt(fan_in))."""
    params = []
    for fan_in, fan_out in zip(layer_sizes[:-1], layer_sizes[1:]):
        key, kw, kb = jax.random.split(key, 3)
        bound = float(fan_in) ** -0.5
        w = jax.random.uniform(kw, (fan_out, fan_in), jnp.float32,
                               -bound, bound)
        b = jax.random.uniform(kb, (fan_out,), jnp.float32, -bound, bound)
        params.append((w, b))
    return params


def fc_network_ref(x, params, compute_dtype=jnp.bfloat16):
    """Pure-JAX reference of FCNetwork.forward with the same dtype pattern
    as the kernel (stream in compute_dtype, accumulate / bias / tanh in f32)."""
    cd = compute_dtype
    out = x.astype(cd)
    *hidden, (w_act, b_act) = params
    for w, b in hidden:
        out = jnp.tanh(
            jnp.dot(out, w.T.astype(cd), preferred_element_type=jnp.float32)
            + b.astype(jnp.float32))
        out = out.astype(cd)
    return (jnp.dot(out, w_act.T.astype(cd),
                    preferred_element_type=jnp.float32)
            + b_act.astype(jnp.float32))


if __name__ == "__main__":
    # FCNetwork(obs_dim=16, act_dim=8, hidden_sizes=[32, 32],
    #           nonlinearity='tanh') -> layer_sizes = (16, 32, 32, 8)
    obs_dim, act_dim = 16, 8
    hidden_sizes = (32, 32)
    layer_sizes = (obs_dim,) + hidden_sizes + (act_dim,)
    batch = 500   # deliberately NOT a multiple of the tile: exercises padding

    key = jax.random.PRNGKey(0)
    key, kx = jax.random.split(key)
    x = jax.random.normal(kx, (batch, obs_dim), jnp.float32)
    params = init_fc_params(key, layer_sizes)

    out = fc_network_forward(x, params)   # default bm -> grid of 2 steps
    out = jax.block_until_ready(out)

    assert out.shape == (batch, act_dim), out.shape
    assert out.dtype == jnp.float32, out.dtype

    ref = fc_network_ref(x, params)
    max_err = float(jnp.max(jnp.abs(out - ref)))
    assert jnp.allclose(out, ref, atol=1e-4, rtol=1e-4), f"max err {max_err}"

    print("KERNEL_OK")
</pallas_src>

<mosaic_0001>
module attributes {stable_mosaic.version = 11 : i64} {
  func.func @fc_network_kernel(%arg0: i32, %arg1: memref<256x16xbf16, #tpu.memory_space<vmem>>, %arg2: memref<16x32xbf16, #tpu.memory_space<vmem>>, %arg3: memref<1x32xf32, #tpu.memory_space<vmem>>, %arg4: memref<32x32xbf16, #tpu.memory_space<vmem>>, %arg5: memref<1x32xf32, #tpu.memory_space<vmem>>, %arg6: memref<8x32xbf16, #tpu.memory_space<vmem>>, %arg7: memref<8x1xf32, #tpu.memory_space<vmem>>, %arg8: memref<8x256xf32, #tpu.memory_space<vmem>>) attributes {dimension_semantics = [#tpu.dimension_semantics<parallel>], iteration_bounds = array<i64: 2>, scalar_prefetch = 0 : i64, scratch_operands = 0 : i64, tpu.core_type = #tpu.core_type<tc>, window_params = [{transform_indices = @transform_0, window_bounds = array<i64: 256, 16>}, {pipeline_mode = #tpu.pipeline_mode<synchronous>, transform_indices = @transform_1, window_bounds = array<i64: 16, 32>}, {pipeline_mode = #tpu.pipeline_mode<synchronous>, transform_indices = @transform_2, window_bounds = array<i64: 1, 32>}, {pipeline_mode = #tpu.pipeline_mode<synchronous>, transform_indices = @transform_3, window_bounds = array<i64: 32, 32>}, {pipeline_mode = #tpu.pipeline_mode<synchronous>, transform_indices = @transform_4, window_bounds = array<i64: 1, 32>}, {pipeline_mode = #tpu.pipeline_mode<synchronous>, transform_indices = @transform_5, window_bounds = array<i64: 8, 32>}, {pipeline_mode = #tpu.pipeline_mode<synchronous>, transform_indices = @transform_6, window_bounds = array<i64: 8, 1>}, {transform_indices = @transform_7, window_bounds = array<i64: 8, 256>}]} {
    %c0 = arith.constant 0 : index
    %c0_0 = arith.constant 0 : index
    %0 = vector.load %arg1[%c0, %c0_0] : memref<256x16xbf16, #tpu.memory_space<vmem>>, vector<256x16xbf16>
    %c0_1 = arith.constant 0 : index
    %c0_2 = arith.constant 0 : index
    %1 = vector.load %arg2[%c0_1, %c0_2] : memref<16x32xbf16, #tpu.memory_space<vmem>>, vector<16x32xbf16>
    %cst = arith.constant dense<0.000000e+00> : vector<256x32xf32>
    %2 = tpu.matmul %0, %1, %cst {dimension_numbers = #tpu.dot_dimension_numbers<[1], [0], [0], [1], [0, 0, 1, 1], [], []>} : vector<256x16xbf16>, vector<16x32xbf16>, vector<256x32xf32> -> vector<256x32xf32>
    %c0_3 = arith.constant 0 : index
    %c0_4 = arith.constant 0 : index
    %3 = vector.load %arg3[%c0_3, %c0_4] : memref<1x32xf32, #tpu.memory_space<vmem>>, vector<1x32xf32>
    %4 = vector.broadcast %3 : vector<1x32xf32> to vector<256x32xf32>
    %5 = arith.addf %2, %4 : vector<256x32xf32>
    %6 = math.tanh %5 : vector<256x32xf32>
    %7 = arith.truncf %6 : vector<256x32xf32> to vector<256x32xbf16>
    %c0_5 = arith.constant 0 : index
    %c0_6 = arith.constant 0 : index
    %8 = vector.load %arg4[%c0_5, %c0_6] : memref<32x32xbf16, #tpu.memory_space<vmem>>, vector<32x32xbf16>
    %cst_7 = arith.constant dense<0.000000e+00> : vector<256x32xf32>
    %9 = tpu.matmul %7, %8, %cst_7 {dimension_numbers = #tpu.dot_dimension_numbers<[1], [0], [0], [1], [0, 0, 1, 1], [], []>} : vector<256x32xbf16>, vector<32x32xbf16>, vector<256x32xf32> -> vector<256x32xf32>
    %c0_8 = arith.constant 0 : index
    %c0_9 = arith.constant 0 : index
    %10 = vector.load %arg5[%c0_8, %c0_9] : memref<1x32xf32, #tpu.memory_space<vmem>>, vector<1x32xf32>
    %11 = vector.broadcast %10 : vector<1x32xf32> to vector<256x32xf32>
    %12 = arith.addf %9, %11 : vector<256x32xf32>
    %13 = math.tanh %12 : vector<256x32xf32>
    %14 = arith.truncf %13 : vector<256x32xf32> to vector<256x32xbf16>
    %c0_10 = arith.constant 0 : index
    %c0_11 = arith.constant 0 : index
    %15 = vector.load %arg6[%c0_10, %c0_11] : memref<8x32xbf16, #tpu.memory_space<vmem>>, vector<8x32xbf16>
    %cst_12 = arith.constant dense<0.000000e+00> : vector<8x256xf32>
    %16 = tpu.matmul %15, %14, %cst_12 {dimension_numbers = #tpu.dot_dimension_numbers<[1], [1], [0], [0], [0, 0, 1, 0], [], []>} : vector<8x32xbf16>, vector<256x32xbf16>, vector<8x256xf32> -> vector<8x256xf32>
    %c0_13 = arith.constant 0 : index
    %c0_14 = arith.constant 0 : index
    %17 = vector.load %arg7[%c0_13, %c0_14] : memref<8x1xf32, #tpu.memory_space<vmem>>, vector<8x1xf32>
    %18 = vector.broadcast %17 : vector<8x1xf32> to vector<8x256xf32>
    %19 = arith.addf %16, %18 : vector<8x256xf32>
    %c0_15 = arith.constant 0 : index
    %c0_16 = arith.constant 0 : index
    %20 = vector.load %arg8[%c0_15, %c0_16] : memref<8x256xf32, #tpu.memory_space<vmem>>, vector<8x256xf32>
    tpu.vector_store %arg8[%c0_15, %c0_16], %19 {strides = array<i32>} : memref<8x256xf32, #tpu.memory_space<vmem>>, vector<8x256xf32>,
    return
  }
  func.func @transform_0(%arg0: i32) -> (i32, i32) {
    %c0_i32 = arith.constant 0 : i32
    %c0_i32_0 = arith.constant 0 : i32
    return %arg0, %c0_i32 : i32, i32
  }
  func.func @transform_1(%arg0: i32) -> (i32, i32) {
    %c0_i32 = arith.constant 0 : i32
    %c0_i32_0 = arith.constant 0 : i32
    %c0_i32_1 = arith.constant 0 : i32
    return %c0_i32, %c0_i32_0 : i32, i32
  }
  func.func @transform_2(%arg0: i32) -> (i32, i32) {
    %c0_i32 = arith.constant 0 : i32
    %c0_i32_0 = arith.constant 0 : i32
    %c0_i32_1 = arith.constant 0 : i32
    return %c0_i32, %c0_i32_0 : i32, i32
  }
  func.func @transform_3(%arg0: i32) -> (i32, i32) {
    %c0_i32 = arith.constant 0 : i32
    %c0_i32_0 = arith.constant 0 : i32
    %c0_i32_1 = arith.constant 0 : i32
    return %c0_i32, %c0_i32_0 : i32, i32
  }
  func.func @transform_4(%arg0: i32) -> (i32, i32) {
    %c0_i32 = arith.constant 0 : i32
    %c0_i32_0 = arith.constant 0 : i32
    %c0_i32_1 = arith.constant 0 : i32
    return %c0_i32, %c0_i32_0 : i32, i32
  }
  func.func @transform_5(%arg0: i32) -> (i32, i32) {
    %c0_i32 = arith.constant 0 : i32
    %c0_i32_0 = arith.constant 0 : i32
    %c0_i32_1 = arith.constant 0 : i32
    return %c0_i32, %c0_i32_0 : i32, i32
  }
  func.func @transform_6(%arg0: i32) -> (i32, i32) {
    %c0_i32 = arith.constant 0 : i32
    %c0_i32_0 = arith.constant 0 : i32
    %c0_i32_1 = arith.constant 0 : i32
    return %c0_i32, %c0_i32_0 : i32, i32
  }
  func.func @transform_7(%arg0: i32) -> (i32, i32) {
    %c0_i32 = arith.constant 0 : i32
    %c0_i32_0 = arith.constant 0 : i32
    return %c0_i32, %arg0 : i32, i32
  }
}

</mosaic_0001>

<llo_original>
// kernel: tpu_custom_call.1
$region0: #{tpu_custom_call.1}
  #allocation0 [shape = 'u32[]', space=smem, size = 0x4, offset = 0x4, fixed_abs, tag = 'smem constant byte address 0x4 - core index']
  #allocation1 [shape = 'u32[144,128]{1,0:T(1,128)}', space=vmem, size = 0x12000, scoped, tag = 'internal scratch']
  %s0 = inlined_call_operand.vmem [shape: bf16[512,16], index: 0, kind: input, shape index: {}]
  %s1 = inlined_call_operand.vmem [shape: bf16[16,32], index: 1, kind: input, shape index: {}]
  %s2 = inlined_call_operand.vmem [shape: f32[1,32], index: 2, kind: input, shape index: {}]
  %s3 = inlined_call_operand.vmem [shape: bf16[32,32], index: 3, kind: input, shape index: {}]
  %s4 = inlined_call_operand.vmem [shape: f32[1,32], index: 4, kind: input, shape index: {}]
  %s5 = inlined_call_operand.vmem [shape: bf16[8,32], index: 5, kind: input, shape index: {}]
  %s6 = inlined_call_operand.vmem [shape: f32[8,1], index: 6, kind: input, shape index: {}]
  %s7 = inlined_call_operand.hbm [shape: f32[8,512], index: 7, kind: output, shape index: {}]
  %s8 = sld [smem:[#allocation0]]
  $region61: #{tpu_custom_call.1} parent=0
    _
  %s10 = ssub.s32 1, %s8
  %s11 = scalar_select 0, %s10, %s8
  $region1: #{tpu_custom_call.1} parent=0
    #allocation2 [shape = 'u8[16384]{0}', space=vmem, size = 0x4000, scoped, tag = 'output window, operand 0']
    #allocation3 [shape = 's32[2]{0}', space=sflag, size = 0x8, scoped, tag = 'scoped memory for tpu_custom_call.1']
    %12 = vsyncpa [#allocation3], 0
    %s13 = scalar_lea.sflag [#allocation3], 1
    %14 = vsyncpa %s13, 0
    loop: start=0, step=1, limit=4
    $region2: #{tpu_custom_call.1} parent=1 // loop_pre_header
      _
    $region3: #{tpu_custom_call.1} parent=1 // loop_header
      %s16 = sphi 0, %s20
      %p17 = scmp.ge.s32.totalorder %s16, 4
      %s26 = sphi 0, %s28
      %s29 = sphi 0, %s26
      %s30 = sphi 0, %s29
      %s46 = sphi 0, %s30
      %s50 = sphi 0, %s50
      %s52 = sphi 0, %s50
      %s53 = sphi 0, %s52
      %s67 = sphi 0, %s53
      %s71 = sphi 0, %s71
      %s73 = sphi 0, %s71
      %s74 = sphi 0, %s73
      %s88 = sphi 0, %s74
      %s92 = sphi 0, %s92
      %s94 = sphi 0, %s92
      %s95 = sphi 0, %s94
      %s109 = sphi 0, %s95
      %s113 = sphi 0, %s113
      %s115 = sphi 0, %s113
      %s116 = sphi 0, %s115
      %s130 = sphi 0, %s116
      %s134 = sphi 0, %s134
      %s136 = sphi 0, %s134
      %s137 = sphi 0, %s136
      %s151 = sphi 0, %s137
      %s155 = sphi 0, %s155
      %s157 = sphi 0, %s155
      %s158 = sphi 0, %s157
      %s172 = sphi 0, %s158
      %s178 = sphi 0, %s180
      %s181 = sphi 0, %s178
      %s182 = sphi 0, %s181
      %s198 = sphi 0, %s182
    $region4: #{tpu_custom_call.1} parent=1 // loop_header_branch
      %19 = sbr.rel (%p17) target = $region8
    $region5: #{tpu_custom_call.1} parent=1 // loop_body
      %s21 = ssub.s32 %s16, 1
      %s22 = ssub.s32 %s16, 2
      %s23 = sadd.s32 %s16, 1
      %s24 = ssub.s32 %s16, %s23
      %p25 = scmp.eq.s32.totalorder %s24, 0
      %s27 = sadd.s32 %s26, 1
      %s28 = scalar_select %p25, %s26, %s27
      %p31 = pneg %p25
      %p32 = scmp.eq.s32.totalorder %s16, 1
      %p33 = por %p31, %p32
      %p34 = scmp.ne.s32.totalorder %s26, %s29
      %p35 = scmp.eq.s32.totalorder %s16, 0
      %p36 = por %p34, %p35
      %p37 = scmp.ne.s32.totalorder %s26, %s29
      %p38 = scmp.eq.s32.totalorder %s21, 1
      %p39 = por %p37, %p38
      %p40 = scmp.ne.s32.totalorder %s29, %s30
      %p41 = scmp.eq.s32.totalorder %s21, 0
      %p42 = por %p40, %p41
      %p43 = scmp.ne.s32.totalorder %s29, %s30
      %p44 = scmp.eq.s32.totalorder %s22, 1
      %p45 = por %p43, %p44
      %p47 = scmp.ne.s32.totalorder %s30, %s46
      %p48 = scmp.eq.s32.totalorder %s22, 0
      %p49 = por %p47, %p48
      %s51 = sadd.s32 %s50, 1
      %p54 = scmp.eq.s32.totalorder %s16, 1
      %p55 = scmp.ne.s32.totalorder %s50, %s52
      %p56 = scmp.eq.s32.totalorder %s16, 0
      %p57 = por %p55, %p56
      %p58 = scmp.ne.s32.totalorder %s50, %s52
      %p59 = scmp.eq.s32.totalorder %s21, 1
      %p60 = por %p58, %p59
      %p61 = scmp.ne.s32.totalorder %s52, %s53
      %p62 = scmp.eq.s32.totalorder %s21, 0
      %p63 = por %p61, %p62
      %p64 = scmp.ne.s32.totalorder %s52, %s53
      %p65 = scmp.eq.s32.totalorder %s22, 1
      %p66 = por %p64, %p65
      %p68 = scmp.ne.s32.totalorder %s53, %s67
      %p69 = scmp.eq.s32.totalorder %s22, 0
      %p70 = por %p68, %p69
      %s72 = sadd.s32 %s71, 1
      %p75 = scmp.eq.s32.totalorder %s16, 1
      %p76 = scmp.ne.s32.totalorder %s71, %s73
      %p77 = scmp.eq.s32.totalorder %s16, 0
      %p78 = por %p76, %p77
      %p79 = scmp.ne.s32.totalorder %s71, %s73
      %p80 = scmp.eq.s32.totalorder %s21, 1
      %p81 = por %p79, %p80
      %p82 = scmp.ne.s32.totalorder %s73, %s74
      %p83 = scmp.eq.s32.totalorder %s21, 0
      %p84 = por %p82, %p83
      %p85 = scmp.ne.s32.totalorder %s73, %s74
      %p86 = scmp.eq.s32.totalorder %s22, 1
      %p87 = por %p85, %p86
      %p89 = scmp.ne.s32.totalorder %s74, %s88
      %p90 = scmp.eq.s32.totalorder %s22, 0
      %p91 = por %p89, %p90
      %s93 = sadd.s32 %s92, 1
      %p96 = scmp.eq.s32.totalorder %s16, 1
      %p97 = scmp.ne.s32.totalorder %s92, %s94
      %p98 = scmp.eq.s32.totalorder %s16, 0
      %p99 = por %p97, %p98
      %p100 = scmp.ne.s32.totalorder %s92, %s94
      %p101 = scmp.eq.s32.totalorder %s21, 1
      %p102 = por %p100, %p101
      %p103 = scmp.ne.s32.totalorder %s94, %s95
      %p104 = scmp.eq.s32.totalorder %s21, 0
      %p105 = por %p103, %p104
      %p106 = scmp.ne.s32.totalorder %s94, %s95
      %p107 = scmp.eq.s32.totalorder %s22, 1
      %p108 = por %p106, %p107
      %p110 = scmp.ne.s32.totalorder %s95, %s109
      %p111 = scmp.eq.s32.totalorder %s22, 0
      %p112 = por %p110, %p111
      %s114 = sadd.s32 %s113, 1
      %p117 = scmp.eq.s32.totalorder %s16, 1
      %p118 = scmp.ne.s32.totalorder %s113, %s115
      %p119 = scmp.eq.s32.totalorder %s16, 0
      %p120 = por %p118, %p119
      %p121 = scmp.ne.s32.totalorder %s113, %s115
      %p122 = scmp.eq.s32.totalorder %s21, 1
      %p123 = por %p121, %p122
      %p124 = scmp.ne.s32.totalorder %s115, %s116
      %p125 = scmp.eq.s32.totalorder %s21, 0
      %p126 = por %p124, %p125
      %p127 = scmp.ne.s32.totalorder %s115, %s116
      %p128 = scmp.eq.s32.totalorder %s22, 1
      %p129 = por %p127, %p128
      %p131 = scmp.ne.s32.totalorder %s116, %s130
      %p132 = scmp.eq.s32.totalorder %s22, 0
      %p133 = por %p131, %p132
      %s135 = sadd.s32 %s134, 1
      %p138 = scmp.eq.s32.totalorder %s16, 1
      %p139 = scmp.ne.s32.totalorder %s134, %s136
      %p140 = scmp.eq.s32.totalorder %s16, 0
      %p141 = por %p139, %p140
      %p142 = scmp.ne.s32.totalorder %s134, %s136
      %p143 = scmp.eq.s32.totalorder %s21, 1
      %p144 = por %p142, %p143
      %p145 = scmp.ne.s32.totalorder %s136, %s137
      %p146 = scmp.eq.s32.totalorder %s21, 0
      %p147 = por %p145, %p146
      %p148 = scmp.ne.s32.totalorder %s136, %s137
      %p149 = scmp.eq.s32.totalorder %s22, 1
      %p150 = por %p148, %p149
      %p152 = scmp.ne.s32.totalorder %s137, %s151
      %p153 = scmp.eq.s32.totalorder %s22, 0
      %p154 = por %p152, %p153
      %s156 = sadd.s32 %s155, 1
      %p159 = scmp.eq.s32.totalorder %s16, 1
      %p160 = scmp.ne.s32.totalorder %s155, %s157
      %p161 = scmp.eq.s32.totalorder %s16, 0
      %p162 = por %p160, %p161
      %p163 = scmp.ne.s32.totalorder %s155, %s157
      %p164 = scmp.eq.s32.totalorder %s21, 1
      %p165 = por %p163, %p164
      %p166 = scmp.ne.s32.totalorder %s157, %s158
      %p167 = scmp.eq.s32.totalorder %s21, 0
      %p168 = por %p166, %p167
      %p169 = scmp.ne.s32.totalorder %s157, %s158
      %p170 = scmp.eq.s32.totalorder %s22, 1
      %p171 = por %p169, %p170
      %p173 = scmp.ne.s32.totalorder %s158, %s172
      %p174 = scmp.eq.s32.totalorder %s22, 0
      %p175 = por %p173, %p174
      %s176 = ssub.s32 %s16, %s23
      %p177 = scmp.eq.s32.totalorder %s176, 0
      %s179 = sadd.s32 %s178, 1
      %s180 = scalar_select %p177, %s178, %s179
      %p183 = pneg %p177
      %p184 = scmp.eq.s32.totalorder %s16, 1
      %p185 = por %p183, %p184
      %p186 = scmp.ne.s32.totalorder %s178, %s181
      %p187 = scmp.eq.s32.totalorder %s16, 0
      %p188 = por %p186, %p187
      %p189 = scmp.ne.s32.totalorder %s178, %s181
      %p190 = scmp.eq.s32.totalorder %s21, 1
      %p191 = por %p189, %p190
      %p192 = scmp.ne.s32.totalorder %s181, %s182
      %p193 = scmp.eq.s32.totalorder %s21, 0
      %p194 = por %p192, %p193
      %p195 = scmp.ne.s32.totalorder %s181, %s182
      %p196 = scmp.eq.s32.totalorder %s22, 1
      %p197 = por %p195, %p196
      %p199 = scmp.ne.s32.totalorder %s182, %s198
      %p200 = scmp.eq.s32.totalorder %s22, 0
      %p201 = por %p199, %p200
      %p202 = scmp.le.s32.totalorder 1, %s16
      %p203 = scmp.lt.s32.totalorder %s16, 3
      %p204 = pnand %p202, %p203
      %p205 = pneg %p204
      // Predicated region
      $region9: #{tpu_custom_call.1} parent=5 // pred_check
        _
      $region10: #{tpu_custom_call.1} parent=5 // pred_check_branch
        %207 = sbr.rel (%p204) target = $region12
      $region11: #{tpu_custom_call.1} parent=5 // pred_region
        %s208 = ssub.s32 %s16, 1
        // Predicated region
        $region13: #{tpu_custom_call.1} parent=11 // pred_check
          %p209 = pneg %p63
        $region14: #{tpu_custom_call.1} parent=11 // pred_check_branch
          %211 = sbr.rel (%p209) target = $region16
        $region15: #{tpu_custom_call.1} parent=11 // pred_region
          _
        $region16: #{tpu_custom_call.1} parent=11 // pred_fallthru
          _
        // Predicated region
        $region17: #{tpu_custom_call.1} parent=11 // pred_check
          %p212 = pneg %p84
        $region18: #{tpu_custom_call.1} parent=11 // pred_check_branch
          %214 = sbr.rel (%p212) target = $region20
        $region19: #{tpu_custom_call.1} parent=11 // pred_region
          _
        $region20: #{tpu_custom_call.1} parent=11 // pred_fallthru
          _
        // Predicated region
        $region21: #{tpu_custom_call.1} parent=11 // pred_check
          %p215 = pneg %p105
        $region22: #{tpu_custom_call.1} parent=11 // pred_check_branch
          %217 = sbr.rel (%p215) target = $region24
        $region23: #{tpu_custom_call.1} parent=11 // pred_region
          _
        $region24: #{tpu_custom_call.1} parent=11 // pred_fallthru
          _
        // Predicated region
        $region25: #{tpu_custom_call.1} parent=11 // pred_check
          %p218 = pneg %p126
        $region26: #{tpu_custom_call.1} parent=11 // pred_check_branch
          %220 = sbr.rel (%p218) target = $region28
        $region27: #{tpu_custom_call.1} parent=11 // pred_region
          _
        $region28: #{tpu_custom_call.1} parent=11 // pred_fallthru
          _
        // Predicated region
        $region29: #{tpu_custom_call.1} parent=11 // pred_check
          %p221 = pneg %p147
        $region30: #{tpu_custom_call.1} parent=11 // pred_check_branch
          %223 = sbr.rel (%p221) target = $region32
        $region31: #{tpu_custom_call.1} parent=11 // pred_region
          _
        $region32: #{tpu_custom_call.1} parent=11 // pred_fallthru
          _
        // Predicated region
        $region33: #{tpu_custom_call.1} parent=11 // pred_check
          %p224 = pneg %p168
        $region34: #{tpu_custom_call.1} parent=11 // pred_check_branch
          %226 = sbr.rel (%p224) target = $region36
        $region35: #{tpu_custom_call.1} parent=11 // pred_region
          _
        $region36: #{tpu_custom_call.1} parent=11 // pred_fallthru
          _
      $region12: #{tpu_custom_call.1} parent=5 // pred_fallthru
        _
      %p227 = scmp.lt.s32.totalorder %s16, 2
      // Predicated region
      $region37: #{tpu_custom_call.1} parent=5 // pred_check
        %p228 = pneg %p227
      $region38: #{tpu_custom_call.1} parent=5 // pred_check_branch
        %230 = sbr.rel (%p228) target = $region40
      $region39: #{tpu_custom_call.1} parent=5 // pred_region
        // Predicated region
        $region41: #{tpu_custom_call.1} parent=39 // pred_check
          %p231 = pneg %p36
        $region42: #{tpu_custom_call.1} parent=39 // pred_check_branch
          %233 = sbr.rel (%p231) target = $region44
        $region43: #{tpu_custom_call.1} parent=39 // pred_region
          %s234 = smul.u32 32, %s16
          %p235 = scmp.lt.s32.totalorder %s234, 63
          %s236 = scalar_select %p235, %s234, 63
          %s237 = smul.addr %s236, 4
          %s238 = scalar_lea.vmem %s0, %s237
          %s239 = smul.u32 32, %s16
        $region44: #{tpu_custom_call.1} parent=39 // pred_fallthru
          _
      $region40: #{tpu_custom_call.1} parent=5 // pred_fallthru
        _
      %p240 = scmp.le.s32.totalorder 1, %s16
      %p241 = scmp.lt.s32.totalorder %s16, 3
      %p242 = pnand %p240, %p241
      %p243 = pneg %p242
      // Predicated region
      $region45: #{tpu_custom_call.1} parent=5 // pred_check
        _
      $region46: #{tpu_custom_call.1} parent=5 // pred_check_branch
        %245 = sbr.rel (%p242) target = $region48
      $region47: #{tpu_custom_call.1} parent=5 // pred_region
        %s246 = ssub.s32 %s16, 1
        %s247 = smul.u32 32, %s21
        %p248 = scmp.lt.s32.totalorder %s247, 63
        %s249 = scalar_select %p248, %s247, 63
        %s250 = smul.addr %s249, 4
        %s251 = scalar_lea.vmem %s0, %s250
        %p252 = pneg %p42
        %p253 = pneg %p39
        %p254 = pneg %p63
        %p255 = pneg %p60
        %p256 = pneg %p84
        %p257 = pneg %p81
        %p258 = pneg %p105
        %p259 = pneg %p102
        %p260 = pneg %p126
        %p261 = pneg %p123
        %p262 = pneg %p147
        %p263 = pneg %p144
        %p264 = pneg %p168
        %p265 = pneg %p165
        %p266 = pneg %p194
        %p267 = pneg %p191
        %s268 = sand.u32 %s181, 1
        %s269 = scalar_lea.sflag [#allocation3], %s268
        %s270 = sand.u32 %s181, 1
        %s271 = smul.addr %s270, 16
        %s272 = scalar_lea.vmem [#allocation2], %s271
        %s273 = smul.u32 32, %s21
        %p274 = scmp.lt.s32.totalorder %s273, 63
        %s275 = scalar_select %p274, %s273, 63
        %s276 = smul.addr %s275, 4
        %s277 = scalar_lea.vmem %s0, %s276
        %s278 = smul.u32 32, %s21
        %s279 = smul.u32 2, %s21
        %v281 = vld [vmem:[%s277] sm:$0xf]
        %v282 = vld [vmem:[%s277 + $0x4] sm:$0xf]
        %v283 = vld [vmem:[%s277 + $0x8] sm:$0xf]
        %v284 = vld [vmem:[%s277 + $0xc] sm:$0xf]
        %v285 = vld [vmem:[%s277 + $0x10] sm:$0xf]
        %v286 = vld [vmem:[%s277 + $0x14] sm:$0xf]
        %v287 = vld [vmem:[%s277 + $0x18] sm:$0xf]
        %v288 = vld [vmem:[%s277 + $0x1c] sm:$0xf]
        %v289 = vld [vmem:[%s277 + $0x20] sm:$0xf]
        %v290 = vld [vmem:[%s277 + $0x24] sm:$0xf]
        %v291 = vld [vmem:[%s277 + $0x28] sm:$0xf]
        %v292 = vld [vmem:[%s277 + $0x2c] sm:$0xf]
        %v293 = vld [vmem:[%s277 + $0x30] sm:$0xf]
        %v294 = vld [vmem:[%s277 + $0x34] sm:$0xf]
        %v295 = vld [vmem:[%s277 + $0x38] sm:$0xf]
        %v296 = vld [vmem:[%s277 + $0x3c] sm:$0xf]
        %v297 = vld [vmem:[%s277 + $0x40] sm:$0xf]
        %v298 = vld [vmem:[%s277 + $0x44] sm:$0xf]
        %v299 = vld [vmem:[%s277 + $0x48] sm:$0xf]
        %v300 = vld [vmem:[%s277 + $0x4c] sm:$0xf]
        %v301 = vld [vmem:[%s277 + $0x50] sm:$0xf]
        %v302 = vld [vmem:[%s277 + $0x54] sm:$0xf]
        %v303 = vld [vmem:[%s277 + $0x58] sm:$0xf]
        %v304 = vld [vmem:[%s277 + $0x5c] sm:$0xf]
        %v305 = vld [vmem:[%s277 + $0x60] sm:$0xf]
        %v306 = vld [vmem:[%s277 + $0x64] sm:$0xf]
        %v307 = vld [vmem:[%s277 + $0x68] sm:$0xf]
        %v308 = vld [vmem:[%s277 + $0x6c] sm:$0xf]
        %v309 = vld [vmem:[%s277 + $0x70] sm:$0xf]
        %v310 = vld [vmem:[%s277 + $0x74] sm:$0xf]
        %v311 = vld [vmem:[%s277 + $0x78] sm:$0xf]
        %v312 = vld [vmem:[%s277 + $0x7c] sm:$0xf]
        %v313 = vld [vmem:[%s1] sm:$0xf]
        %v314 = vld [vmem:[%s1 + $0x4] sm:$0xf]
        %v315 = vld [vmem:[%s2] sm:$0x1]
        %v317 = vlaneseq
        %v318 = vshrl.u32 %v317, 7
        %v319 = vsub.s32 0, %v318
        %v320 = vrot.slane %v315, %v319
        %v354 = vunpack.c.l.b16 %v281
        %v355 = vunpack.c.l.b16 %v282
        %v356 = vunpack.c.l.b16 %v283
        %v357 = vunpack.c.l.b16 %v284
        %v358 = vunpack.c.l.b16 %v285
        %v359 = vunpack.c.l.b16 %v286
        %v360 = vunpack.c.l.b16 %v287
        %v361 = vunpack.c.l.b16 %v288
        %v362 = vunpack.c.l.b16 %v289
        %v363 = vunpack.c.l.b16 %v290
        %v364 = vunpack.c.l.b16 %v291
        %v365 = vunpack.c.l.b16 %v292
        %v366 = vunpack.c.l.b16 %v293
        %v367 = vunpack.c.l.b16 %v294
        %v368 = vunpack.c.l.b16 %v295
        %v369 = vunpack.c.l.b16 %v296
        %v370 = vunpack.c.l.b16 %v297
        %v371 = vunpack.c.l.b16 %v298
        %v372 = vunpack.c.l.b16 %v299
        %v373 = vunpack.c.l.b16 %v300
        %v374 = vunpack.c.l.b16 %v301
        %v375 = vunpack.c.l.b16 %v302
        %v376 = vunpack.c.l.b16 %v303
        %v377 = vunpack.c.l.b16 %v304
        %v378 = vunpack.c.l.b16 %v305
        %v379 = vunpack.c.l.b16 %v306
        %v380 = vunpack.c.l.b16 %v307
        %v381 = vunpack.c.l.b16 %v308
        %v382 = vunpack.c.l.b16 %v309
        %v383 = vunpack.c.l.b16 %v310
        %v384 = vunpack.c.l.b16 %v311
        %v385 = vunpack.c.l.b16 %v312
        %v386 = vpack.c.b16 %v355, %v354
        %v387 = vpack.c.b16 %v357, %v356
        %v388 = vpack.c.b16 %v359, %v358
        %v389 = vpack.c.b16 %v361, %v360
        %v390 = vpack.c.b16 %v363, %v362
        %v391 = vpack.c.b16 %v365, %v364
        %v392 = vpack.c.b16 %v367, %v366
        %v393 = vpack.c.b16 %v369, %v368
        %v394 = vpack.c.b16 %v371, %v370
        %v395 = vpack.c.b16 %v373, %v372
        %v396 = vpack.c.b16 %v375, %v374
        %v397 = vpack.c.b16 %v377, %v376
        %v398 = vpack.c.b16 %v379, %v378
        %v399 = vpack.c.b16 %v381, %v380
        %v400 = vpack.c.b16 %v383, %v382
        %v401 = vpack.c.b16 %v385, %v384
        %v404 = vunpack.c.l.b16 %v313
        %v405 = vunpack.c.l.b16 %v314
        %v406 = vpack.c.b16 %v405, %v404
        %vm408 = vcmask 130048
        %v410 = vsel %vm408, %v386, 0
        %v413 = vsel %vm408, %v387, 0
        %v416 = vsel %vm408, %v388, 0
        %v419 = vsel %vm408, %v389, 0
        %v422 = vsel %vm408, %v390, 0
        %v425 = vsel %vm408, %v391, 0
        %v428 = vsel %vm408, %v392, 0
        %v431 = vsel %vm408, %v393, 0
        %v434 = vsel %vm408, %v394, 0
        %v437 = vsel %vm408, %v395, 0
        %v440 = vsel %vm408, %v396, 0
        %v443 = vsel %vm408, %v397, 0
        %v446 = vsel %vm408, %v398, 0
        %v449 = vsel %vm408, %v399, 0
        %v452 = vsel %vm408, %v400, 0
        %v455 = vsel %vm408, %v401, 0
        %457 = vmatprep.subr.bf16.mxu0 0
        %458 = vmatpush1.bf16.msra.mxu0 0
        %459 = vmatprep.subr.bf16.mxu0 0
        %460 = vmatpush1.bf16.msra.mxu0 0
        %461 = vmatprep.subr.bf16.mxu0 0
        %462 = vmatpush1.bf16.msra.mxu0 0
        %463 = vmatprep.subr.bf16.mxu0 0
        %464 = vmatpush1.bf16.msra.mxu0 0
        %465 = vmatprep.subr.bf16.mxu0 0
        %466 = vmatpush1.bf16.msra.mxu0 0
        %467 = vmatprep.subr.bf16.mxu0 0
        %468 = vmatpush1.bf16.msra.mxu0 0
        %469 = vmatprep.subr.bf16.mxu0 0
        %470 = vmatpush1.bf16.msra.mxu0 0
        %471 = vmatprep.subr.bf16.mxu0 0
        %472 = vmatpush1.bf16.msra.mxu0 %v406
        %473 = vmatprep.subr.bf16.mxu0 0
        %474 = vmatpush2.bf16.msra.mxu0 0
        %475 = vmatprep.subr.bf16.mxu0 0
        %476 = vmatpush2.bf16.msra.mxu0 0
        %477 = vmatprep.subr.bf16.mxu0 0
        %478 = vmatpush2.bf16.msra.mxu0 0
        %479 = vmatprep.subr.bf16.mxu0 0
        %480 = vmatpush2.bf16.msra.mxu0 0
        %481 = vmatprep.subr.bf16.mxu0 0
        %482 = vmatpush2.bf16.msra.mxu0 0
        %483 = vmatprep.subr.bf16.mxu0 0
        %484 = vmatpush2.bf16.msra.mxu0 0
        %485 = vmatprep.subr.bf16.mxu0 0
        %486 = vmatpush2.bf16.msra.mxu0 0
        %487 = vmatprep.subr.bf16.mxu0 0
        %488 = vmatpush2.bf16.msra.mxu0 0
        %489 = vmatprep.mubr.bf16.mxu0 0
        %490 = vmatmul.mubr.bf16.gmra.mxu0 %v410
        %v491 = vpop.f32.mrf.mxu0
        %v492 = vadd.f32 %v320, %v491
        %v493 = vpop.f32.mrf.mxu0
        %v494 = vpop.f32.mrf.mxu0
        %v495 = vadd.f32 %v320, %v494
        %v496 = vpop.f32.mrf.mxu0
        %497 = vmatprep.mubr.bf16.mxu0 0
        %498 = vmatmul.mubr.bf16.gmra.mxu0 %v413
        %v499 = vpop.f32.mrf.mxu0
        %v500 = vadd.f32 %v320, %v499
        %v501 = vpop.f32.mrf.mxu0
        %v502 = vpop.f32.mrf.mxu0
        %v503 = vadd.f32 %v320, %v502
        %v504 = vpop.f32.mrf.mxu0
        %505 = vmatprep.mubr.bf16.mxu0 0
        %506 = vmatmul.mubr.bf16.gmra.mxu0 %v416
        %v507 = vpop.f32.mrf.mxu0
        %v508 = vadd.f32 %v320, %v507
        %v509 = vpop.f32.mrf.mxu0
        %v510 = vpop.f32.mrf.mxu0
        %v511 = vadd.f32 %v320, %v510
        %v512 = vpop.f32.mrf.mxu0
        %513 = vmatprep.mubr.bf16.mxu0 0
        %514 = vmatmul.mubr.bf16.gmra.mxu0 %v419
        %v515 = vpop.f32.mrf.mxu0
        %v516 = vadd.f32 %v320, %v515
        %v517 = vpop.f32.mrf.mxu0
        %v518 = vpop.f32.mrf.mxu0
        %v519 = vadd.f32 %v320, %v518
        %v520 = vpop.f32.mrf.mxu0
        %521 = vmatprep.mubr.bf16.mxu0 0
        %522 = vmatmul.mubr.bf16.gmra.mxu0 %v422
        %v523 = vpop.f32.mrf.mxu0
        %v524 = vadd.f32 %v320, %v523
        %v525 = vpop.f32.mrf.mxu0
        %v526 = vpop.f32.mrf.mxu0
        %v527 = vadd.f32 %v320, %v526
        %v528 = vpop.f32.mrf.mxu0
        %529 = vmatprep.mubr.bf16.mxu0 0
        %530 = vmatmul.mubr.bf16.gmra.mxu0 %v425
        %v531 = vpop.f32.mrf.mxu0
        %v532 = vadd.f32 %v320, %v531
        %v533 = vpop.f32.mrf.mxu0
        %v534 = vpop.f32.mrf.mxu0
        %v535 = vadd.f32 %v320, %v534
        %v536 = vpop.f32.mrf.mxu0
        %537 = vmatprep.mubr.bf16.mxu0 0
        %538 = vmatmul.mubr.bf16.gmra.mxu0 %v428
        %v539 = vpop.f32.mrf.mxu0
        %v540 = vadd.f32 %v320, %v539
        %v541 = vpop.f32.mrf.mxu0
        %v542 = vpop.f32.mrf.mxu0
        %v543 = vadd.f32 %v320, %v542
        %v544 = vpop.f32.mrf.mxu0
        %545 = vmatprep.mubr.bf16.mxu0 0
        %546 = vmatmul.mubr.bf16.gmra.mxu0 %v431
        %v547 = vpop.f32.mrf.mxu0
        %v548 = vadd.f32 %v320, %v547
        %v549 = vpop.f32.mrf.mxu0
        %v550 = vpop.f32.mrf.mxu0
        %v551 = vadd.f32 %v320, %v550
        %v552 = vpop.f32.mrf.mxu0
        %553 = vmatprep.mubr.bf16.mxu0 0
        %554 = vmatmul.mubr.bf16.gmra.mxu0 %v434
        %v555 = vpop.f32.mrf.mxu0
        %v556 = vadd.f32 %v320, %v555
        %v557 = vpop.f32.mrf.mxu0
        %v558 = vpop.f32.mrf.mxu0
        %v559 = vadd.f32 %v320, %v558
        %v560 = vpop.f32.mrf.mxu0
        %561 = vmatprep.mubr.bf16.mxu0 0
        %562 = vmatmul.mubr.bf16.gmra.mxu0 %v437
        %v563 = vpop.f32.mrf.mxu0
        %v564 = vadd.f32 %v320, %v563
        %v565 = vpop.f32.mrf.mxu0
        %v566 = vpop.f32.mrf.mxu0
        %v567 = vadd.f32 %v320, %v566
        %v568 = vpop.f32.mrf.mxu0
        %569 = vmatprep.mubr.bf16.mxu0 0
        %570 = vmatmul.mubr.bf16.gmra.mxu0 %v440
        %v571 = vpop.f32.mrf.mxu0
        %v572 = vadd.f32 %v320, %v571
        %v573 = vpop.f32.mrf.mxu0
        %v574 = vpop.f32.mrf.mxu0
        %v575 = vadd.f32 %v320, %v574
        %v576 = vpop.f32.mrf.mxu0
        %577 = vmatprep.mubr.bf16.mxu0 0
        %578 = vmatmul.mubr.bf16.gmra.mxu0 %v443
        %v579 = vpop.f32.mrf.mxu0
        %v580 = vadd.f32 %v320, %v579
        %v581 = vpop.f32.mrf.mxu0
        %v582 = vpop.f32.mrf.mxu0
        %v583 = vadd.f32 %v320, %v582
        %v584 = vpop.f32.mrf.mxu0
        %585 = vmatprep.mubr.bf16.mxu0 0
        %586 = vmatmul.mubr.bf16.gmra.mxu0 %v446
        %v587 = vpop.f32.mrf.mxu0
        %v588 = vadd.f32 %v320, %v587
        %v589 = vpop.f32.mrf.mxu0
        %v590 = vpop.f32.mrf.mxu0
        %v591 = vadd.f32 %v320, %v590
        %v592 = vpop.f32.mrf.mxu0
        %593 = vmatprep.mubr.bf16.mxu0 0
        %594 = vmatmul.mubr.bf16.gmra.mxu0 %v449
        %v595 = vpop.f32.mrf.mxu0
        %v596 = vadd.f32 %v320, %v595
        %v597 = vpop.f32.mrf.mxu0
        %v598 = vpop.f32.mrf.mxu0
        %v599 = vadd.f32 %v320, %v598
        %v600 = vpop.f32.mrf.mxu0
        %601 = vmatprep.mubr.bf16.mxu0 0
        %602 = vmatmul.mubr.bf16.gmra.mxu0 %v452
        %v603 = vpop.f32.mrf.mxu0
        %v604 = vadd.f32 %v320, %v603
        %v605 = vpop.f32.mrf.mxu0
        %v606 = vpop.f32.mrf.mxu0
        %v607 = vadd.f32 %v320, %v606
        %v608 = vpop.f32.mrf.mxu0
        %609 = vmatprep.mubr.bf16.mxu0 0
        %610 = vmatmul.mubr.bf16.gmra.mxu0 %v455
        %v611 = vpop.f32.mrf.mxu0
        %v612 = vadd.f32 %v320, %v611
        %v613 = vpop.f32.mrf.mxu0
        %v614 = vpop.f32.mrf.mxu0
        %v615 = vadd.f32 %v320, %v614
        %v616 = vpop.f32.mrf.mxu0
        %617 = vdwg.mxu0
        %v618 = vtanh.pop %v492
        %v619 = vtanh.pop %v495
        %v620 = vtanh.pop %v500
        %v621 = vtanh.pop %v503
        %v622 = vtanh.pop %v508
        %v623 = vtanh.pop %v511
        %v624 = vtanh.pop %v516
        %v625 = vtanh.pop %v519
        %v626 = vtanh.pop %v524
        %v627 = vtanh.pop %v527
        %v628 = vtanh.pop %v532
        %v629 = vtanh.pop %v535
        %v630 = vtanh.pop %v540
        %v631 = vtanh.pop %v543
        %v632 = vtanh.pop %v548
        %v633 = vtanh.pop %v551
        %v634 = vtanh.pop %v556
        %v635 = vtanh.pop %v559
        %v636 = vtanh.pop %v564
        %v637 = vtanh.pop %v567
        %v638 = vtanh.pop %v572
        %v639 = vtanh.pop %v575
        %v640 = vtanh.pop %v580
        %v641 = vtanh.pop %v583
        %v642 = vtanh.pop %v588
        %v643 = vtanh.pop %v591
        %v644 = vtanh.pop %v596
        %v645 = vtanh.pop %v599
        %v646 = vtanh.pop %v604
        %v647 = vtanh.pop %v607
        %v648 = vtanh.pop %v612
        %v649 = vtanh.pop %v615
        %v650 = vpack.c.bf16 %v619, %v618
        %v651 = vpack.c.bf16 %v621, %v620
        %v652 = vpack.c.bf16 %v623, %v622
        %v653 = vpack.c.bf16 %v625, %v624
        %v654 = vpack.c.bf16 %v627, %v626
        %v655 = vpack.c.bf16 %v629, %v628
        %v656 = vpack.c.bf16 %v631, %v630
        %v657 = vpack.c.bf16 %v633, %v632
        %v658 = vpack.c.bf16 %v635, %v634
        %v659 = vpack.c.bf16 %v637, %v636
        %v660 = vpack.c.bf16 %v639, %v638
        %v661 = vpack.c.bf16 %v641, %v640
        %v662 = vpack.c.bf16 %v643, %v642
        %v663 = vpack.c.bf16 %v645, %v644
        %v664 = vpack.c.bf16 %v647, %v646
        %v665 = vpack.c.bf16 %v649, %v648
        %v666 = vld [vmem:[%s3] sm:$0xf]
        %v667 = vld [vmem:[%s3 + $0x4] sm:$0xf]
        %v668 = vld [vmem:[%s3 + $0x8] sm:$0xf]
        %v669 = vld [vmem:[%s3 + $0xc] sm:$0xf]
        %v670 = vld [vmem:[%s4] sm:$0x1]
        %v672 = vlaneseq
        %v673 = vshrl.u32 %v672, 7
        %v674 = vsub.s32 0, %v673
        %v675 = vrot.slane %v670, %v674
        %v681 = vunpack.c.l.b16 %v666
        %v682 = vunpack.c.l.b16 %v667
        %v683 = vunpack.c.l.b16 %v668
        %v684 = vunpack.c.l.b16 %v669
        %v685 = vpack.c.b16 %v682, %v681
        %v686 = vpack.c.b16 %v684, %v683
        %vm689 = vcmask 261120
        %v691 = vsel %vm689, %v650, 0
        %v694 = vsel %vm689, %v651, 0
        %v697 = vsel %vm689, %v652, 0
        %v700 = vsel %vm689, %v653, 0
        %v703 = vsel %vm689, %v654, 0
        %v706 = vsel %vm689, %v655, 0
        %v709 = vsel %vm689, %v656, 0
        %v712 = vsel %vm689, %v657, 0
        %v715 = vsel %vm689, %v658, 0
        %v718 = vsel %vm689, %v659, 0
        %v721 = vsel %vm689, %v660, 0
        %v724 = vsel %vm689, %v661, 0
        %v727 = vsel %vm689, %v662, 0
        %v730 = vsel %vm689, %v663, 0
        %v733 = vsel %vm689, %v664, 0
        %v736 = vsel %vm689, %v665, 0
        %738 = vmatprep.subr.bf16.mxu0 0
        %739 = vmatpush1.bf16.msra.mxu0 0
        %740 = vmatprep.subr.bf16.mxu0 0
        %741 = vmatpush1.bf16.msra.mxu0 0
        %742 = vmatprep.subr.bf16.mxu0 0
        %743 = vmatpush1.bf16.msra.mxu0 0
        %744 = vmatprep.subr.bf16.mxu0 0
        %745 = vmatpush1.bf16.msra.mxu0 0
        %746 = vmatprep.subr.bf16.mxu0 0
        %747 = vmatpush1.bf16.msra.mxu0 0
        %748 = vmatprep.subr.bf16.mxu0 0
        %749 = vmatpush1.bf16.msra.mxu0 0
        %750 = vmatprep.subr.bf16.mxu0 0
        %751 = vmatpush1.bf16.msra.mxu0 %v686
        %752 = vmatprep.subr.bf16.mxu0 0
        %753 = vmatpush1.bf16.msra.mxu0 %v685
        %754 = vmatprep.subr.bf16.mxu0 0
        %755 = vmatpush2.bf16.msra.mxu0 0
        %756 = vmatprep.subr.bf16.mxu0 0
        %757 = vmatpush2.bf16.msra.mxu0 0
        %758 = vmatprep.subr.bf16.mxu0 0
        %759 = vmatpush2.bf16.msra.mxu0 0
        %760 = vmatprep.subr.bf16.mxu0 0
        %761 = vmatpush2.bf16.msra.mxu0 0
        %762 = vmatprep.subr.bf16.mxu0 0
        %763 = vmatpush2.bf16.msra.mxu0 0
        %764 = vmatprep.subr.bf16.mxu0 0
        %765 = vmatpush2.bf16.msra.mxu0 0
        %766 = vmatprep.subr.bf16.mxu0 0
        %767 = vmatpush2.bf16.msra.mxu0 0
        %768 = vmatprep.subr.bf16.mxu0 0
        %769 = vmatpush2.bf16.msra.mxu0 0
        %770 = vmatprep.mubr.bf16.mxu0 0
        %771 = vmatmul.mubr.bf16.gmra.mxu0 %v691
        %v772 = vpop.f32.mrf.mxu0
        %v773 = vadd.f32 %v675, %v772
        %v774 = vpop.f32.mrf.mxu0
        %v775 = vpop.f32.mrf.mxu0
        %v776 = vadd.f32 %v675, %v775
        %v777 = vpop.f32.mrf.mxu0
        %778 = vmatprep.mubr.bf16.mxu0 0
        %779 = vmatmul.mubr.bf16.gmra.mxu0 %v694
        %v780 = vpop.f32.mrf.mxu0
        %v781 = vadd.f32 %v675, %v780
        %v782 = vpop.f32.mrf.mxu0
        %v783 = vpop.f32.mrf.mxu0
        %v784 = vadd.f32 %v675, %v783
        %v785 = vpop.f32.mrf.mxu0
        %786 = vmatprep.mubr.bf16.mxu0 0
        %787 = vmatmul.mubr.bf16.gmra.mxu0 %v697
        %v788 = vpop.f32.mrf.mxu0
        %v789 = vadd.f32 %v675, %v788
        %v790 = vpop.f32.mrf.mxu0
        %v791 = vpop.f32.mrf.mxu0
        %v792 = vadd.f32 %v675, %v791
        %v793 = vpop.f32.mrf.mxu0
        %794 = vmatprep.mubr.bf16.mxu0 0
        %795 = vmatmul.mubr.bf16.gmra.mxu0 %v700
        %v796 = vpop.f32.mrf.mxu0
        %v797 = vadd.f32 %v675, %v796
        %v798 = vpop.f32.mrf.mxu0
        %v799 = vpop.f32.mrf.mxu0
        %v800 = vadd.f32 %v675, %v799
        %v801 = vpop.f32.mrf.mxu0
        %802 = vmatprep.mubr.bf16.mxu0 0
        %803 = vmatmul.mubr.bf16.gmra.mxu0 %v703
        %v804 = vpop.f32.mrf.mxu0
        %v805 = vadd.f32 %v675, %v804
        %v806 = vpop.f32.mrf.mxu0
        %v807 = vpop.f32.mrf.mxu0
        %v808 = vadd.f32 %v675, %v807
        %v809 = vpop.f32.mrf.mxu0
        %810 = vmatprep.mubr.bf16.mxu0 0
        %811 = vmatmul.mubr.bf16.gmra.mxu0 %v706
        %v812 = vpop.f32.mrf.mxu0
        %v813 = vadd.f32 %v675, %v812
        %v814 = vpop.f32.mrf.mxu0
        %v815 = vpop.f32.mrf.mxu0
        %v816 = vadd.f32 %v675, %v815
        %v817 = vpop.f32.mrf.mxu0
        %818 = vmatprep.mubr.bf16.mxu0 0
        %819 = vmatmul.mubr.bf16.gmra.mxu0 %v709
        %v820 = vpop.f32.mrf.mxu0
        %v821 = vadd.f32 %v675, %v820
        %v822 = vpop.f32.mrf.mxu0
        %v823 = vpop.f32.mrf.mxu0
        %v824 = vadd.f32 %v675, %v823
        %v825 = vpop.f32.mrf.mxu0
        %826 = vmatprep.mubr.bf16.mxu0 0
        %827 = vmatmul.mubr.bf16.gmra.mxu0 %v712
        %v828 = vpop.f32.mrf.mxu0
        %v829 = vadd.f32 %v675, %v828
        %v830 = vpop.f32.mrf.mxu0
        %v831 = vpop.f32.mrf.mxu0
        %v832 = vadd.f32 %v675, %v831
        %v833 = vpop.f32.mrf.mxu0
        %834 = vmatprep.mubr.bf16.mxu0 0
        %835 = vmatmul.mubr.bf16.gmra.mxu0 %v715
        %v836 = vpop.f32.mrf.mxu0
        %v837 = vadd.f32 %v675, %v836
        %v838 = vpop.f32.mrf.mxu0
        %v839 = vpop.f32.mrf.mxu0
        %v840 = vadd.f32 %v675, %v839
        %v841 = vpop.f32.mrf.mxu0
        %842 = vmatprep.mubr.bf16.mxu0 0
        %843 = vmatmul.mubr.bf16.gmra.mxu0 %v718
        %v844 = vpop.f32.mrf.mxu0
        %v845 = vadd.f32 %v675, %v844
        %v846 = vpop.f32.mrf.mxu0
        %v847 = vpop.f32.mrf.mxu0
        %v848 = vadd.f32 %v675, %v847
        %v849 = vpop.f32.mrf.mxu0
        %850 = vmatprep.mubr.bf16.mxu0 0
        %851 = vmatmul.mubr.bf16.gmra.mxu0 %v721
        %v852 = vpop.f32.mrf.mxu0
        %v853 = vadd.f32 %v675, %v852
        %v854 = vpop.f32.mrf.mxu0
        %v855 = vpop.f32.mrf.mxu0
        %v856 = vadd.f32 %v675, %v855
        %v857 = vpop.f32.mrf.mxu0
        %858 = vmatprep.mubr.bf16.mxu0 0
        %859 = vmatmul.mubr.bf16.gmra.mxu0 %v724
        %v860 = vpop.f32.mrf.mxu0
        %v861 = vadd.f32 %v675, %v860
        %v862 = vpop.f32.mrf.mxu0
        %v863 = vpop.f32.mrf.mxu0
        %v864 = vadd.f32 %v675, %v863
        %v865 = vpop.f32.mrf.mxu0
        %866 = vmatprep.mubr.bf16.mxu0 0
        %867 = vmatmul.mubr.bf16.gmra.mxu0 %v727
        %v868 = vpop.f32.mrf.mxu0
        %v869 = vadd.f32 %v675, %v868
        %v870 = vpop.f32.mrf.mxu0
        %v871 = vpop.f32.mrf.mxu0
        %v872 = vadd.f32 %v675, %v871
        %v873 = vpop.f32.mrf.mxu0
        %874 = vmatprep.mubr.bf16.mxu0 0
        %875 = vmatmul.mubr.bf16.gmra.mxu0 %v730
        %v876 = vpop.f32.mrf.mxu0
        %v877 = vadd.f32 %v675, %v876
        %v878 = vpop.f32.mrf.mxu0
        %v879 = vpop.f32.mrf.mxu0
        %v880 = vadd.f32 %v675, %v879
        %v881 = vpop.f32.mrf.mxu0
        %882 = vmatprep.mubr.bf16.mxu0 0
        %883 = vmatmul.mubr.bf16.gmra.mxu0 %v733
        %v884 = vpop.f32.mrf.mxu0
        %v885 = vadd.f32 %v675, %v884
        %v886 = vpop.f32.mrf.mxu0
        %v887 = vpop.f32.mrf.mxu0
        %v888 = vadd.f32 %v675, %v887
        %v889 = vpop.f32.mrf.mxu0
        %890 = vmatprep.mubr.bf16.mxu0 0
        %891 = vmatmul.mubr.bf16.gmra.mxu0 %v736
        %v892 = vpop.f32.mrf.mxu0
        %v893 = vadd.f32 %v675, %v892
        %v894 = vpop.f32.mrf.mxu0
        %v895 = vpop.f32.mrf.mxu0
        %v896 = vadd.f32 %v675, %v895
        %v897 = vpop.f32.mrf.mxu0
        %898 = vdwg.mxu0
        %v899 = vtanh.pop %v773
        %v900 = vtanh.pop %v776
        %v901 = vtanh.pop %v781
        %v902 = vtanh.pop %v784
        %v903 = vtanh.pop %v789
        %v904 = vtanh.pop %v792
        %v905 = vtanh.pop %v797
        %v906 = vtanh.pop %v800
        %v907 = vtanh.pop %v805
        %v908 = vtanh.pop %v808
        %v909 = vtanh.pop %v813
        %v910 = vtanh.pop %v816
        %v911 = vtanh.pop %v821
        %v912 = vtanh.pop %v824
        %v913 = vtanh.pop %v829
        %v914 = vtanh.pop %v832
        %v915 = vtanh.pop %v837
        %v916 = vtanh.pop %v840
        %v917 = vtanh.pop %v845
        %v918 = vtanh.pop %v848
        %v919 = vtanh.pop %v853
        %v920 = vtanh.pop %v856
        %v921 = vtanh.pop %v861
        %v922 = vtanh.pop %v864
        %v923 = vtanh.pop %v869
        %v924 = vtanh.pop %v872
        %v925 = vtanh.pop %v877
        %v926 = vtanh.pop %v880
        %v927 = vtanh.pop %v885
        %v928 = vtanh.pop %v888
        %v929 = vtanh.pop %v893
        %v930 = vtanh.pop %v896
        %v931 = vpack.c.bf16 %v900, %v899
        %v932 = vpack.c.bf16 %v902, %v901
        %v933 = vpack.c.bf16 %v904, %v903
        %v934 = vpack.c.bf16 %v906, %v905
        %v935 = vpack.c.bf16 %v908, %v907
        %v936 = vpack.c.bf16 %v910, %v909
        %v937 = vpack.c.bf16 %v912, %v911
        %v938 = vpack.c.bf16 %v914, %v913
        %v939 = vpack.c.bf16 %v916, %v915
        %v940 = vpack.c.bf16 %v918, %v917
        %v941 = vpack.c.bf16 %v920, %v919
        %v942 = vpack.c.bf16 %v922, %v921
        %v943 = vpack.c.bf16 %v924, %v923
        %v944 = vpack.c.bf16 %v926, %v925
        %v945 = vpack.c.bf16 %v928, %v927
        %v946 = vpack.c.bf16 %v930, %v929
        %v947 = vld [vmem:[%s5] sm:$0xf]
        %v948 = vld [vmem:[%s6] sm:$0xff]
        %950 = vset.pattern.permute.xlu0 0
        %951 = vperm.xlu0 %950, %v948
        %v952 = vpop.permute.xlu0 %951
        %v955 = vsel %vm689, %v947, 0
        %v958 = vsel %vm689, %v931, 0
        %v961 = vsel %vm689, %v932, 0
        %v964 = vsel %vm689, %v933, 0
        %v967 = vsel %vm689, %v934, 0
        %v970 = vsel %vm689, %v935, 0
        %v973 = vsel %vm689, %v936, 0
        %v976 = vsel %vm689, %v937, 0
        %v979 = vsel %vm689, %v938, 0
        %v982 = vsel %vm689, %v939, 0
        %v985 = vsel %vm689, %v940, 0
        %v988 = vsel %vm689, %v941, 0
        %v991 = vsel %vm689, %v942, 0
        %v994 = vsel %vm689, %v943, 0
        %v997 = vsel %vm689, %v944, 0
        %v1000 = vsel %vm689, %v945, 0
        %v1003 = vsel %vm689, %v946, 0
        %1005 = vmatprep.subr.bf16.mxu0 0
        %1006 = vmatpush1.bf16.xpose.msra.mxu0 %v979
        %1007 = vmatprep.subr.bf16.mxu0 0
        %1008 = vmatpush1.bf16.xpose.msra.mxu0 %v976
        %1009 = vmatprep.subr.bf16.mxu0 0
        %1010 = vmatpush1.bf16.xpose.msra.mxu0 %v973
        %1011 = vmatprep.subr.bf16.mxu0 0
        %1012 = vmatpush1.bf16.xpose.msra.mxu0 %v970
        %1013 = vmatprep.subr.bf16.mxu0 0
        %1014 = vmatpush1.bf16.xpose.msra.mxu0 %v967
        %1015 = vmatprep.subr.bf16.mxu0 0
        %1016 = vmatpush1.bf16.xpose.msra.mxu0 %v964
        %1017 = vmatprep.subr.bf16.mxu0 0
        %1018 = vmatpush1.bf16.xpose.msra.mxu0 %v961
        %1019 = vmatprep.subr.bf16.mxu0 0
        %1020 = vmatpush1.bf16.xpose.msra.mxu0 %v958
        %1021 = vmatprep.subr.bf16.mxu0 0
        %1022 = vmatpush2.bf16.xpose.msra.mxu0 %v1003
        %1023 = vmatprep.subr.bf16.mxu0 0
        %1024 = vmatpush2.bf16.xpose.msra.mxu0 %v1000
        %1025 = vmatprep.subr.bf16.mxu0 0
        %1026 = vmatpush2.bf16.xpose.msra.mxu0 %v997
        %1027 = vmatprep.subr.bf16.mxu0 0
        %1028 = vmatpush2.bf16.xpose.msra.mxu0 %v994
        %1029 = vmatprep.subr.bf16.mxu0 0
        %1030 = vmatpush2.bf16.xpose.msra.mxu0 %v991
        %1031 = vmatprep.subr.bf16.mxu0 0
        %1032 = vmatpush2.bf16.xpose.msra.mxu0 %v988
        %1033 = vmatprep.subr.bf16.mxu0 0
        %1034 = vmatpush2.bf16.xpose.msra.mxu0 %v985
        %1035 = vmatprep.subr.bf16.mxu0 0
        %1036 = vmatpush2.bf16.xpose.msra.mxu0 %v982
        %1037 = vmatprep.mubr.bf16.mxu0 0
        %1038 = vmatmul.mubr.bf16.gmra.mxu0 %v955
        %v1039 = vpop.f32.mrf.mxu0
        %v1040 = vadd.f32 %v952, %v1039
        %v1041 = vpop.f32.mrf.mxu0
        %v1042 = vadd.f32 %v952, %v1041
        %v1043 = vpop.f32.mrf.mxu0
        %v1044 = vpop.f32.mrf.mxu0
        %1045 = vdwg.mxu0
        %1046 = vst [vmem:[%s272] sm:$0xff] %v1040
        %1047 = vst [vmem:[%s272 + $0x8] sm:$0xff] %v1042
        %s1048 = sand.u32 %s181, 1
        %s1049 = scalar_lea.sflag [#allocation3], %s1048
        %s1050 = sand.u32 %s181, 1
        %s1051 = smul.addr %s1050, 16
        %s1052 = scalar_lea.vmem [#allocation2], %s1051
        // Predicated region
        $region49: #{tpu_custom_call.1} parent=47 // pred_check
          %p1053 = pneg %p191
        $region50: #{tpu_custom_call.1} parent=47 // pred_check_branch
          %1055 = sbr.rel (%p1053) target = $region52
        $region51: #{tpu_custom_call.1} parent=47 // pred_region
          %s1056 = smul.u32 2, %s21
          %s1058 = ssub.s32 256, 256
          %1059 = vsyncadd %s1049, %s1058
          %s1060 = smul.addr %s1056, 128
          %s1061 = scalar_lea.hbm %s7, %s1060
          %s1063 = sshll.u32 %s1052, 4
          %s1064 = int_to_ptr.vmem [resolvable:$true] %s1063
          %1066 = dma.vmem_to_hbm [thread:$0]  %s1064, 256, %s1061, %s1049
        $region52: #{tpu_custom_call.1} parent=47 // pred_fallthru
          _
      $region48: #{tpu_custom_call.1} parent=5 // pred_fallthru
        _
      %p1067 = scmp.le.s32.totalorder 2, %s16
      // Predicated region
      $region53: #{tpu_custom_call.1} parent=5 // pred_check
        %p1068 = pneg %p1067
      $region54: #{tpu_custom_call.1} parent=5 // pred_check_branch
        %1070 = sbr.rel (%p1068) target = $region56
      $region55: #{tpu_custom_call.1} parent=5 // pred_region
        %s1071 = ssub.s32 %s16, 2
        // Predicated region
        $region57: #{tpu_custom_call.1} parent=55 // pred_check
          %p1072 = pneg %p197
        $region58: #{tpu_custom_call.1} parent=55 // pred_check_branch
          %1074 = sbr.rel (%p1072) target = $region60
        $region59: #{tpu_custom_call.1} parent=55 // pred_region
          %s1075 = sand.u32 %s182, 1
          %s1076 = scalar_lea.sflag [#allocation3], %s1075
          %s1077 = sand.u32 %s182, 1
          %s1078 = smul.addr %s1077, 16
          %s1079 = scalar_lea.vmem [#allocation2], %s1078
          %1080 = dma.done %s1076, 256
        $region60: #{tpu_custom_call.1} parent=55 // pred_fallthru
          _
      $region56: #{tpu_custom_call.1} parent=5 // pred_fallthru
        _
    $region6: #{tpu_custom_call.1} parent=1 // loop_footer
      %s20 = sadd.s32 1, %s16
    $region7: #{tpu_custom_call.1} parent=1 // loop_footer_branch
      %15 = sbr.rel target = $region3
    $region8: #{tpu_custom_call.1} parent=1 // loop_exit
      _
    %1081 = vsyncpa [#allocation3], 1
    %s1082 = scalar_lea.sflag [#allocation3], 1
    %1083 = vsyncpa %s1082, 1

</llo_original>
